<compile_context>
chip_gen: v7x
topology: tpu7x:2x2x1
jax: 0.10.0
libtpu: 0.0.40
codegen_flags: <defaults>
</compile_context>

<pallas_src>
import jax
import jax.numpy as jnp
from jax.experimental import pallas as pl
from jax.experimental.pallas import tpu as pltpu

LANES = 128          # lane-padded feature / hidden dims
SLAB_ROWS = 136      # 128 (w2) + 2 (w1 rows) + 3 (biases) + 1 (w3^T) + pad -> mult. of 8

# Row layout of the packed parameter slab (f32, (SLAB_ROWS, LANES)):
#   rows   0:128  w2  padded:  real (128,64) in cols 0:64, cols 64:127 = 0
#   row      128  w1 row for `bacteria` input           (128 lanes, all real)
#   row      129  w1 row for `delta_t`  input           (128 lanes, all real)
#   row      130  b1                                    (128 lanes, all real)
#   row      131  b2 padded: real 64 lanes, lanes 64:127 = 0
#   row      132  w3^T padded: real 64 lanes, lanes 64:127 = 0  (MUST stay 0!)
#   row      133  b3 one-hot: lane 0 = b3, other lanes = 0
#   rows 134:136  zero padding (sublane alignment)
ROW_W1_B, ROW_W1_DT, ROW_B1, ROW_B2, ROW_W3T, ROW_B3 = 128, 129, 130, 131, 132, 133


def policy_kernel(s_ref, p_ref, o_ref):
    # SMEM scalars.
    bact = s_ref[0]
    dt = s_ref[1]

    # Static slab views (zero-cost slices of the single VMEM input).
    w2 = p_ref[0:LANES, :]                      # (128,128), cols 64:127 zero
    w1_b = p_ref[ROW_W1_B:ROW_W1_B + 1, :]      # (1,128)
    w1_dt = p_ref[ROW_W1_DT:ROW_W1_DT + 1, :]   # (1,128)
    b1 = p_ref[ROW_B1:ROW_B1 + 1, :]            # (1,128)
    b2 = p_ref[ROW_B2:ROW_B2 + 1, :]            # (1,128), lanes 64:127 zero
    w3t = p_ref[ROW_W3T:ROW_W3T + 1, :]         # (1,128), lanes 64:127 zero
    b3row = p_ref[ROW_B3:ROW_B3 + 1, :]         # (1,128), one-hot at lane 0

    # fc1 + sigmoid: two scalar-broadcast FMAs on the VPU (no MXU).
    h1 = jax.nn.sigmoid(bact * w1_b + dt * w1_dt + b1)                 # (1,128)
    # TODO(synk): nn.Dropout(p=0.6) is identity in eval/inference mode; a
    # training-mode port would need pltpu.prng_seed + stateful_bernoulli.

    # fc2 + sigmoid: single MXU pass.
    h2 = jax.nn.sigmoid(
        jnp.dot(h1, w2, preferred_element_type=jnp.float32) + b2)      # (1,128)

    # fc3 as elementwise mul + lane reduction (XLU).
    # NOTE: h2 lanes 64:127 are sigmoid(0) = 0.5 (padding, NOT zero); they are
    # neutralized only because w3t lanes 64:127 are stored as exact zeros in
    # the slab -- never fill those pads.
    y = jnp.sum(h2 * w3t + b3row, axis=-1, keepdims=True)              # (1,1)

    # action = delta_t * sigmoid(fc3 output)
    o_ref[...] = dt * jax.nn.sigmoid(y)


def make_params(key):
    """Deterministic parameters mimicking PyTorch nn.Linear default init."""
    def linear(key, fan_in, fan_out):
        k = 1.0 / jnp.sqrt(jnp.float32(fan_in))
        kw, kb = jax.random.split(key)
        w = jax.random.uniform(kw, (fan_in, fan_out), jnp.float32, -k, k)  # = weight.T
        b = jax.random.uniform(kb, (fan_out,), jnp.float32, -k, k)
        return w, b

    k1, k2, k3 = jax.random.split(key, 3)
    w1, b1 = linear(k1, 2, 128)    # (2,128), (128,)
    w2, b2 = linear(k2, 128, 64)   # (128,64), (64,)
    w3, b3 = linear(k3, 64, 1)     # (64,1), (1,)

    slab = jnp.zeros((SLAB_ROWS, LANES), jnp.float32)
    slab = slab.at[0:LANES, 0:64].set(w2)
    slab = slab.at[ROW_W1_B, :].set(w1[0, :])
    slab = slab.at[ROW_W1_DT, :].set(w1[1, :])
    slab = slab.at[ROW_B1, :].set(b1)
    slab = slab.at[ROW_B2, 0:64].set(b2)
    slab = slab.at[ROW_W3T, 0:64].set(w3[:, 0])
    slab = slab.at[ROW_B3, 0].set(b3[0])

    unpadded = dict(w1=w1, b1=b1, w2=w2, b2=b2, w3=w3, b3=b3)
    return slab, unpadded


@jax.jit
def policy_forward(slab, bacteria, delta_t):
    """bacteria, delta_t: f32 arrays of shape (1,). Returns action of shape (1,)."""
    scalars = jnp.concatenate([bacteria, delta_t]).astype(jnp.float32)  # (2,) -> SMEM

    out = pl.pallas_call(
        policy_kernel,
        out_shape=jax.ShapeDtypeStruct((1, 1), jnp.float32),
        in_specs=[
            pl.BlockSpec(memory_space=pltpu.MemorySpace.SMEM),   # [bacteria, delta_t]
            pl.BlockSpec(memory_space=pltpu.MemorySpace.VMEM),   # packed param slab
        ],
        out_specs=pl.BlockSpec(memory_space=pltpu.MemorySpace.VMEM),
    )(scalars, slab)

    return out.reshape(1)  # matches torch output shape (1,)


def policy_reference(up, bacteria, delta_t):
    """Pure-JAX reference of the PyTorch forward (eval mode)."""
    x = jnp.concatenate([bacteria, delta_t], axis=0)          # (2,)
    x = jax.nn.sigmoid(x @ up['w1'] + up['b1'])               # (128,)
    x = jax.nn.sigmoid(x @ up['w2'] + up['b2'])               # (64,)
    x = x @ up['w3'] + up['b3']                               # (1,)
    return delta_t * jax.nn.sigmoid(x)                        # (1,)


if __name__ == "__main__":
    key = jax.random.PRNGKey(0)
    kp, kb, kd = jax.random.split(key, 3)
    slab, unpadded = make_params(kp)

    bacteria = jax.random.uniform(kb, (1,), jnp.float32, 0.0, 10.0)
    delta_t = jax.random.uniform(kd, (1,), jnp.float32, 0.1, 2.0)

    action = jax.block_until_ready(policy_forward(slab, bacteria, delta_t))
    ref = jax.block_until_ready(policy_reference(unpadded, bacteria, delta_t))

    assert action.shape == (1,)
    assert jnp.allclose(action, ref, atol=1e-5, rtol=1e-5), (action, ref)
    print("KERNEL_OK")
</pallas_src>

<mosaic_0001>
module attributes {stable_mosaic.version = 11 : i64} {
  func.func @policy_kernel(%arg0: memref<2xf32, #tpu.memory_space<smem>>, %arg1: memref<136x128xf32, #tpu.memory_space<vmem>>, %arg2: memref<1x1xf32, #tpu.memory_space<vmem>>) attributes {dimension_semantics = [], scalar_prefetch = 0 : i64, scratch_operands = 0 : i64, tpu.core_type = #tpu.core_type<tc>} {
    %c0 = arith.constant 0 : index
    %0 = memref.load %arg0[%c0] : memref<2xf32, #tpu.memory_space<smem>>
    %c1 = arith.constant 1 : index
    %1 = memref.load %arg0[%c1] : memref<2xf32, #tpu.memory_space<smem>>
    %c0_0 = arith.constant 0 : index
    %c0_1 = arith.constant 0 : index
    %2 = vector.load %arg1[%c0_0, %c0_1] : memref<136x128xf32, #tpu.memory_space<vmem>>, vector<128x128xf32>
    %c128 = arith.constant 128 : index
    %c0_2 = arith.constant 0 : index
    %3 = vector.load %arg1[%c128, %c0_2] : memref<136x128xf32, #tpu.memory_space<vmem>>, vector<1x128xf32>
    %c129 = arith.constant 129 : index
    %c0_3 = arith.constant 0 : index
    %4 = vector.load %arg1[%c129, %c0_3] : memref<136x128xf32, #tpu.memory_space<vmem>>, vector<1x128xf32>
    %c130 = arith.constant 130 : index
    %c0_4 = arith.constant 0 : index
    %5 = vector.load %arg1[%c130, %c0_4] : memref<136x128xf32, #tpu.memory_space<vmem>>, vector<1x128xf32>
    %c131 = arith.constant 131 : index
    %c0_5 = arith.constant 0 : index
    %6 = vector.load %arg1[%c131, %c0_5] : memref<136x128xf32, #tpu.memory_space<vmem>>, vector<1x128xf32>
    %c132 = arith.constant 132 : index
    %c0_6 = arith.constant 0 : index
    %7 = vector.load %arg1[%c132, %c0_6] : memref<136x128xf32, #tpu.memory_space<vmem>>, vector<1x128xf32>
    %c133 = arith.constant 133 : index
    %c0_7 = arith.constant 0 : index
    %8 = vector.load %arg1[%c133, %c0_7] : memref<136x128xf32, #tpu.memory_space<vmem>>, vector<1x128xf32>
    %9 = vector.broadcast %0 : f32 to vector<1x128xf32>
    %10 = arith.mulf %9, %3 : vector<1x128xf32>
    %11 = vector.broadcast %1 : f32 to vector<1x128xf32>
    %12 = arith.mulf %11, %4 : vector<1x128xf32>
    %13 = arith.addf %10, %12 : vector<1x128xf32>
    %14 = arith.addf %13, %5 : vector<1x128xf32>
    %15 = arith.negf %14 : vector<1x128xf32>
    %16 = math.exp %15 : vector<1x128xf32>
    %cst = arith.constant 1.000000e+00 : f32
    %17 = vector.broadcast %cst : f32 to vector<1x128xf32>
    %18 = arith.addf %17, %16 : vector<1x128xf32>
    %19 = arith.divf %17, %18 : vector<1x128xf32>
    %cst_8 = arith.constant dense<0.000000e+00> : vector<1x128xf32>
    %20 = tpu.matmul %19, %2, %cst_8 {dimension_numbers = #tpu.dot_dimension_numbers<[1], [0], [0], [1], [0, 0, 1, 1], [], []>} : vector<1x128xf32>, vector<128x128xf32>, vector<1x128xf32> -> vector<1x128xf32>
    %21 = arith.addf %20, %6 : vector<1x128xf32>
    %22 = arith.negf %21 : vector<1x128xf32>
    %23 = math.exp %22 : vector<1x128xf32>
    %cst_9 = arith.constant 1.000000e+00 : f32
    %24 = vector.broadcast %cst_9 : f32 to vector<1x128xf32>
    %25 = arith.addf %24, %23 : vector<1x128xf32>
    %26 = arith.divf %24, %25 : vector<1x128xf32>
    %27 = arith.mulf %26, %7 : vector<1x128xf32>
    %28 = arith.addf %27, %8 : vector<1x128xf32>
    %cst_10 = arith.constant dense<0.000000e+00> : vector<1xf32>
    %29 = vector.multi_reduction <add>, %28, %cst_10 [1] : vector<1x128xf32> to vector<1xf32>
    %30 = vector.shape_cast %29 : vector<1xf32> to vector<1x1xf32>
    %31 = arith.negf %30 : vector<1x1xf32>
    %32 = math.exp %31 : vector<1x1xf32>
    %cst_11 = arith.constant 1.000000e+00 : f32
    %33 = vector.broadcast %cst_11 : f32 to vector<1x1xf32>
    %34 = arith.addf %33, %32 : vector<1x1xf32>
    %35 = arith.divf %33, %34 : vector<1x1xf32>
    %36 = vector.broadcast %1 : f32 to vector<1x1xf32>
    %37 = arith.mulf %36, %35 : vector<1x1xf32>
    %c0_12 = arith.constant 0 : index
    %c0_13 = arith.constant 0 : index
    %38 = vector.load %arg2[%c0_12, %c0_13] : memref<1x1xf32, #tpu.memory_space<vmem>>, vector<1x1xf32>
    tpu.vector_store %arg2[%c0_12, %c0_13], %37 {strides = array<i32>} : memref<1x1xf32, #tpu.memory_space<vmem>>, vector<1x1xf32>,
    return
  }
}

</mosaic_0001>

<llo_original>
// kernel: policy_forward.1
$region0: #{policy_forward.1}
  #allocation0 [shape = 'u32[]', space=smem, size = 0x4, offset = 0x4, fixed_abs, tag = 'smem constant byte address 0x4 - core index']
  #allocation1 [shape = 'u32[144,128]{1,0:T(1,128)}', space=vmem, size = 0x12000, scoped, tag = 'internal scratch']
  %s0 = inlined_call_operand.vmem [shape: f32[2], index: 0, kind: input, shape index: {}]
  %s1 = inlined_call_operand.hbm [shape: f32[136,128], index: 1, kind: input, shape index: {}]
  %s2 = inlined_call_operand.hbm [shape: f32[1,1], index: 2, kind: output, shape index: {}]
  %s3 = sld [smem:[#allocation0]]
  $region26: #{policy_forward.1} parent=0
    _
  %s5 = ssub.s32 1, %s3
  %s6 = scalar_select 0, %s5, %s3
  $region1: #{policy_forward.1} parent=0
    #allocation2 [shape = 'u8[512]{0}', space=smem, size = 0x200, scoped, tag = 'input window, operand 0, single buffered']
    #allocation3 [shape = 's32[1]{0}', space=sflag, size = 0x4, scoped, tag = 'scoped memory for policy_forward.1']
    #allocation4 [shape = 's32[1]{0}', space=sflag, size = 0x4, scoped, tag = 'scoped memory for policy_forward.1']
    #allocation5 [shape = 's32[1]{0}', space=sflag, size = 0x4, scoped, tag = 'scoped memory for policy_forward.1']
    #allocation6 [shape = 'u8[69632]{0}', space=vmem, size = 0x11000, scoped, tag = 'input window, operand 1, single buffered']
    #allocation7 [shape = 'u8[512]{0}', space=vmem, size = 0x400, scoped, tag = 'output window, operand 0, single buffered']
    %7 = vsyncpa [#allocation5], 0
    %8 = vsyncpa [#allocation3], 0
    %9 = vsyncpa [#allocation4], 0
    // Predicated region
    $region2: #{policy_forward.1} parent=1 // pred_check
      _
    $region3: #{policy_forward.1} parent=1 // pred_check_branch
      %11 = sbr.rel (0) target = $region5
    $region4: #{policy_forward.1} parent=1 // pred_region
      %s13 = ssub.s32 16, 16
      %14 = vsyncadd [#allocation5], %s13
      %s16 = sshll.u32 %s0, 4
      %s17 = int_to_ptr.vmem [resolvable:$true] %s16
      %19 = dma.vmem_to_smem %s17, 16, [#allocation2], [#allocation5]
    $region5: #{policy_forward.1} parent=1 // pred_fallthru
      _
    // Predicated region
    $region6: #{policy_forward.1} parent=1 // pred_check
      _
    $region7: #{policy_forward.1} parent=1 // pred_check_branch
      %21 = sbr.rel (0) target = $region9
    $region8: #{policy_forward.1} parent=1 // pred_region
      %s23 = ssub.s32 2176, 2176
      %24 = vsyncadd [#allocation3], %s23
      %s25 = sshll.u32 [#allocation6], 4
      %s26 = int_to_ptr.vmem [resolvable:$true] %s25
      %31 = dma.hbm_to_vmem [thread:$0]  %s1, 2176, %s26, [#allocation3], 128, 128, 8
    $region9: #{policy_forward.1} parent=1 // pred_fallthru
      _
    // Predicated region
    $region10: #{policy_forward.1} parent=1 // pred_check
      _
    $region11: #{policy_forward.1} parent=1 // pred_check_branch
      %33 = sbr.rel (0) target = $region13
    $region12: #{policy_forward.1} parent=1 // pred_region
      %34 = dma.done [#allocation5], 16
    $region13: #{policy_forward.1} parent=1 // pred_fallthru
      _
    // Predicated region
    $region14: #{policy_forward.1} parent=1 // pred_check
      _
    $region15: #{policy_forward.1} parent=1 // pred_check_branch
      %36 = sbr.rel (0) target = $region17
    $region16: #{policy_forward.1} parent=1 // pred_region
      %37 = dma.done [#allocation3], 2176
    $region17: #{policy_forward.1} parent=1 // pred_fallthru
      _
    %38 = sfence
    %s39 = sld [smem:[#allocation2]]
    %s40 = sld [smem:[#allocation2 + $0x1]]
    %v41 = vld [vmem:[#allocation6] sm:$0xff]
    %v42 = vld [vmem:[#allocation6 + $0x8] sm:$0xff]
    %v43 = vld [vmem:[#allocation6 + $0x10] sm:$0xff]
    %v44 = vld [vmem:[#allocation6 + $0x18] sm:$0xff]
    %v45 = vld [vmem:[#allocation6 + $0x20] sm:$0xff]
    %v46 = vld [vmem:[#allocation6 + $0x28] sm:$0xff]
    %v47 = vld [vmem:[#allocation6 + $0x30] sm:$0xff]
    %v48 = vld [vmem:[#allocation6 + $0x38] sm:$0xff]
    %v49 = vld [vmem:[#allocation6 + $0x40] sm:$0xff]
    %v50 = vld [vmem:[#allocation6 + $0x48] sm:$0xff]
    %v51 = vld [vmem:[#allocation6 + $0x50] sm:$0xff]
    %v52 = vld [vmem:[#allocation6 + $0x58] sm:$0xff]
    %v53 = vld [vmem:[#allocation6 + $0x60] sm:$0xff]
    %v54 = vld [vmem:[#allocation6 + $0x68] sm:$0xff]
    %v55 = vld [vmem:[#allocation6 + $0x70] sm:$0xff]
    %v56 = vld [vmem:[#allocation6 + $0x78] sm:$0xff]
    %v57 = vld [vmem:[#allocation6 + $0x80] sm:$0x1]
    %v58 = vld [vmem:[#allocation6 + $0x81] sm:$0x1]
    %v59 = vld [vmem:[#allocation6 + $0x82] sm:$0x1]
    %v60 = vld [vmem:[#allocation6 + $0x83] sm:$0x1]
    %v61 = vld [vmem:[#allocation6 + $0x84] sm:$0x1]
    %v62 = vld [vmem:[#allocation6 + $0x85] sm:$0x1]
    %v63 = vstv %s39
    %v64 = vmul.f32 %v63, %v57
    %v65 = vstv %s40
    %v66 = vmul.f32 %v65, %v58
    %v67 = vadd.f32 %v64, %v66
    %v68 = vadd.f32 %v67, %v59
    %v69 = vxor.u32 %v68, 2147483648
    %v70 = vmul.f32 %v69, 1.442695
    %v71 = vpow.pop %v70
    %v72 = vadd.f32 %v71, 1.0
    %v73 = vrcp.pop %v72
    %v74 = vmul.f32 1.0, %v73
    %75 = vmatprep.subr.mxu0 0.0
    %76 = vmatpush1.msra.mxu0 %v41
    %77 = vmatprep.subr.mxu0 0.0
    %78 = vmatpush1.msra.mxu0 %v42
    %79 = vmatprep.subr.mxu0 0.0
    %80 = vmatpush1.msra.mxu0 %v43
    %81 = vmatprep.subr.mxu0 0.0
    %82 = vmatpush1.msra.mxu0 %v44
    %83 = vmatprep.subr.mxu0 0.0
    %84 = vmatpush1.msra.mxu0 %v45
    %85 = vmatprep.subr.mxu0 0.0
    %86 = vmatpush1.msra.mxu0 %v46
    %87 = vmatprep.subr.mxu0 0.0
    %88 = vmatpush1.msra.mxu0 %v47
    %89 = vmatprep.subr.mxu0 0.0
    %90 = vmatpush1.msra.mxu0 %v48
    %91 = vmatprep.subr.mxu0 0.0
    %92 = vmatpush1.msra.mxu0 %v49
    %93 = vmatprep.subr.mxu0 0.0
    %94 = vmatpush1.msra.mxu0 %v50
    %95 = vmatprep.subr.mxu0 0.0
    %96 = vmatpush1.msra.mxu0 %v51
    %97 = vmatprep.subr.mxu0 0.0
    %98 = vmatpush1.msra.mxu0 %v52
    %99 = vmatprep.subr.mxu0 0.0
    %100 = vmatpush1.msra.mxu0 %v53
    %101 = vmatprep.subr.mxu0 0.0
    %102 = vmatpush1.msra.mxu0 %v54
    %103 = vmatprep.subr.mxu0 0.0
    %104 = vmatpush1.msra.mxu0 %v55
    %105 = vmatprep.subr.mxu0 0.0
    %106 = vmatpush1.msra.mxu0 %v56
    %107 = vmatprep.subr.mxu0 0.0
    %108 = vmatpush1.msra.mxu0 0.0
    %109 = vmatprep.subr.mxu0 0.0
    %110 = vmatpush1.msra.mxu0 0.0
    %111 = vmatprep.subr.mxu0 0.0
    %112 = vmatpush1.msra.mxu0 0.0
    %113 = vmatprep.subr.mxu0 0.0
    %114 = vmatpush1.msra.mxu0 0.0
    %115 = vmatprep.subr.mxu0 0.0
    %116 = vmatpush1.msra.mxu0 0.0
    %117 = vmatprep.subr.mxu0 0.0
    %118 = vmatpush1.msra.mxu0 0.0
    %119 = vmatprep.subr.mxu0 0.0
    %120 = vmatpush1.msra.mxu0 0.0
    %121 = vmatprep.subr.mxu0 0.0
    %122 = vmatpush1.msra.mxu0 0.0
    %123 = vmatprep.subr.mxu0 0.0
    %124 = vmatpush1.msra.mxu0 0.0
    %125 = vmatprep.subr.mxu0 0.0
    %126 = vmatpush1.msra.mxu0 0.0
    %127 = vmatprep.subr.mxu0 0.0
    %128 = vmatpush1.msra.mxu0 0.0
    %129 = vmatprep.subr.mxu0 0.0
    %130 = vmatpush1.msra.mxu0 0.0
    %131 = vmatprep.subr.mxu0 0.0
    %132 = vmatpush1.msra.mxu0 0.0
    %133 = vmatprep.subr.mxu0 0.0
    %134 = vmatpush1.msra.mxu0 0.0
    %135 = vmatprep.subr.mxu0 0.0
    %136 = vmatpush1.msra.mxu0 0.0
    %137 = vmatprep.subr.mxu0 0.0
    %138 = vmatpush1.msra.mxu0 0.0
    %139 = vmatprep.mubr.f32.mxu0 0.0
    %140 = vmatmul.mubr.f32.gmra.mrb[0].mxu0 %v74
    %v141 = vpop.f32.mrb[0].mxu0
    %v142 = vadd.f32 %v60, %v141
    %v143 = vpop.f32.mrb[0].mxu0
    %144 = vdwg.mxu0
    %v145 = vxor.u32 %v142, 2147483648
    %v146 = vmul.f32 %v145, 1.442695
    %v147 = vpow.pop %v146
    %v148 = vadd.f32 %v147, 1.0
    %v149 = vrcp.pop %v148
    %v150 = vmul.f32 1.0, %v149
    %v151 = vmul.f32 %v150, %v61
    %v152 = vadd.f32 %v151, %v62
    %vm153 = vcmask 1040384
    %v154 = vsel %vm153, %v152, 0.0
    %155 = vadd.xlane.f32.xlu0 %v154
    %v156 = vpop.xlane.xlu0 %155
    %v157 = vxor.u32 %v156, 2147483648
    %v158 = vmul.f32 %v157, 1.442695
    %v159 = vpow.pop %v158
    %v160 = vadd.f32 %v159, 1.0
    %v161 = vrcp.pop %v160
    %v162 = vmul.f32 1.0, %v161
    %v163 = vmul.f32 %v65, %v162
    %vm164 = vcmask 0
    %165 = vst.msk [vmem:[#allocation7] sm:$0x1] %vm164, %v163
    // Predicated region
    $region18: #{policy_forward.1} parent=1 // pred_check
      _
    $region19: #{policy_forward.1} parent=1 // pred_check_branch
      %167 = sbr.rel (0) target = $region21
    $region20: #{policy_forward.1} parent=1 // pred_region
      %s169 = ssub.s32 16, 16
      %170 = vsyncadd [#allocation4], %s169
      %s172 = sshll.u32 [#allocation7], 4
      %s173 = int_to_ptr.vmem [resolvable:$true] %s172
      %175 = dma.vmem_to_hbm [thread:$0]  %s173, 16, %s2, [#allocation4]
    $region21: #{policy_forward.1} parent=1 // pred_fallthru
      _
    // Predicated region
    $region22: #{policy_forward.1} parent=1 // pred_check
      _
    $region23: #{policy_forward.1} parent=1 // pred_check_branch
      %177 = sbr.rel (0) target = $region25
    $region24: #{policy_forward.1} parent=1 // pred_region
      %178 = dma.done [#allocation4], 16
    $region25: #{policy_forward.1} parent=1 // pred_fallthru
      _
    %179 = vsyncpa [#allocation3], 1
    %180 = vsyncpa [#allocation4], 1
    %181 = vsyncpa [#allocation5], 1

</llo_original>
